<compile_context>
chip_gen: v7x
topology: tpu7x:2x2x1
jax: 0.10.0
libtpu: 0.0.40
codegen_flags: <defaults>
</compile_context>

<pallas_src>
import functools

import jax
import jax.numpy as jnp
from jax.experimental import pallas as pl
from jax.experimental.pallas import tpu as pltpu


def _round_up(n, m):
    return ((n + m - 1) // m) * m


def _mlp_kernel(x_ref, w1_ref, w2_ref, w3_ref, b_ref, o_ref, *, h1p, h2p, dout):
    # x_ref: (TB, Din) f32 at natural feature width; weights bf16 (lane-padded to 128 where
    # it matters); b_ref: (3, NB) f32 packed biases.
    x = x_ref[...].astype(w1_ref.dtype)  # cheap in-kernel VPU cast (no wrapper pad/cast pass)

    a1 = jnp.dot(x, w1_ref[...], preferred_element_type=jnp.float32) + b_ref[0:1, :h1p]
    a1 = jnp.maximum(a1, 0.0).astype(w2_ref.dtype)

    a2 = jnp.dot(a1, w2_ref[...], preferred_element_type=jnp.float32) + b_ref[1:2, :h2p]
    a2 = jnp.maximum(a2, 0.0).astype(w3_ref.dtype)

    out = jnp.dot(a2, w3_ref[...], preferred_element_type=jnp.float32) + b_ref[2:3, :dout]
    o_ref[...] = out.astype(o_ref.dtype)


def prepare_params(params, compute_dtype=jnp.bfloat16):
    """One-time weight padding / bf16 cast, hoisted out of the per-call forward path.

    params: dict with w1/b1/w2/b2/w3/b3 in (in, out) layout (x @ W + b).
    Zero padding is exact for Linear + ReLU.
    """
    input_dim, h1 = params["w1"].shape
    h2 = params["w2"].shape[1]
    output_dim = params["w3"].shape[1]

    h1_p = _round_up(h1, 128)
    h2_p = _round_up(h2, 128)
    nb = max(h1_p, h2_p, _round_up(output_dim, 128))

    w1_p = jnp.zeros((input_dim, h1_p), compute_dtype).at[:, :h1].set(
        params["w1"].astype(compute_dtype))
    w2_p = jnp.zeros((h1_p, h2_p), compute_dtype).at[:h1, :h2].set(
        params["w2"].astype(compute_dtype))
    # w3 keeps its natural output width: the (B, output_dim) f32 writeback is the dominant
    # HBM stream, so we do not pad it to 128 lanes.
    w3_p = jnp.zeros((h2_p, output_dim), compute_dtype).at[:h2, :].set(
        params["w3"].astype(compute_dtype))

    b_stack = jnp.zeros((3, nb), jnp.float32)
    b_stack = b_stack.at[0, :h1].set(params["b1"].astype(jnp.float32))
    b_stack = b_stack.at[1, :h2].set(params["b2"].astype(jnp.float32))
    b_stack = b_stack.at[2, :output_dim].set(params["b3"].astype(jnp.float32))

    return {"w1": w1_p, "w2": w2_p, "w3": w3_p, "b": b_stack}


@functools.partial(jax.jit, static_argnames=("batch_tile",))
def regression_model_forward(x, prepared, *, batch_tile=2048):
    """x: (B, input_dim) float32; prepared: output of prepare_params()."""
    B, input_dim = x.shape
    w1, w2, w3, b = prepared["w1"], prepared["w2"], prepared["w3"], prepared["b"]
    assert w1.shape[0] == input_dim, (w1.shape, input_dim)
    h1_p = w1.shape[1]
    h2_p = w2.shape[1]
    output_dim = w3.shape[1]
    nb = b.shape[1]

    # Batch tiling: big, sublane-aligned tiles (per-step overhead dominates this tiny MLP's
    # compute), capped at the (rounded) batch size.
    b8 = _round_up(B, 8)
    tb = min(_round_up(max(batch_tile, 8), 8), b8)
    grid_n = pl.cdiv(B, tb)
    # Keep >=2 grid steps when the batch is big enough so both v7x TensorCores get work.
    if grid_n == 1 and b8 >= 16:
        tb = _round_up(pl.cdiv(b8, 2), 8)
        grid_n = pl.cdiv(B, tb)

    flops = 2 * B * (input_dim * h1_p + h1_p * h2_p + h2_p * output_dim)
    bytes_accessed = (x.size * x.dtype.itemsize
                      + w1.size * w1.dtype.itemsize
                      + w2.size * w2.dtype.itemsize
                      + w3.size * w3.dtype.itemsize
                      + b.size * b.dtype.itemsize
                      + B * output_dim * 4)

    kernel = functools.partial(_mlp_kernel, h1p=h1_p, h2p=h2_p, dout=output_dim)

    out = pl.pallas_call(
        kernel,
        out_shape=jax.ShapeDtypeStruct((B, output_dim), jnp.float32),
        grid=(grid_n,),
        in_specs=[
            pl.BlockSpec((tb, input_dim), lambda i: (i, 0)),     # x: batch-tiled, natural width
            pl.BlockSpec((input_dim, h1_p), lambda i: (0, 0)),   # w1: resident in VMEM
            pl.BlockSpec((h1_p, h2_p), lambda i: (0, 0)),        # w2: resident in VMEM
            pl.BlockSpec((h2_p, output_dim), lambda i: (0, 0)),  # w3: resident in VMEM
            pl.BlockSpec((3, nb), lambda i: (0, 0)),             # packed biases: resident
        ],
        out_specs=pl.BlockSpec((tb, output_dim), lambda i: (i, 0)),
        compiler_params=pltpu.CompilerParams(
            dimension_semantics=("parallel",),
            vmem_limit_bytes=32 * 1024 * 1024,
        ),
        cost_estimate=pl.CostEstimate(
            flops=flops, transcendentals=0, bytes_accessed=bytes_accessed),
    )(x, w1, w2, w3, b)

    return out


def init_params(key, input_dim, output_dim):
    # Deterministic synthetic init (shapes match the nn.Linear layers; stored as (in, out)).
    k1, k2, k3, k4, k5, k6 = jax.random.split(key, 6)
    scale = 0.1
    return {
        "w1": scale * jax.random.normal(k1, (input_dim, 64), jnp.float32),
        "b1": scale * jax.random.normal(k2, (64,), jnp.float32),
        "w2": scale * jax.random.normal(k3, (64, 128), jnp.float32),
        "b2": scale * jax.random.normal(k4, (128,), jnp.float32),
        "w3": scale * jax.random.normal(k5, (128, output_dim), jnp.float32),
        "b3": scale * jax.random.normal(k6, (output_dim,), jnp.float32),
    }


def reference_forward(x, params):
    h1 = jnp.maximum(x @ params["w1"] + params["b1"], 0.0)
    h2 = jnp.maximum(h1 @ params["w2"] + params["b2"], 0.0)
    return h2 @ params["w3"] + params["b3"]


if __name__ == "__main__":
    key = jax.random.PRNGKey(0)
    kx, kp, kx2 = jax.random.split(key, 3)

    batch = 8
    input_dim = 32
    output_dim = 16

    x = jax.random.normal(kx, (batch, input_dim), jnp.float32)
    params = init_params(kp, input_dim, output_dim)
    prepared = prepare_params(params)  # one-time pad/cast, hoisted out of the forward path

    # Small-batch path (single tile).
    out = jax.block_until_ready(regression_model_forward(x, prepared))
    ref = reference_forward(x, params)
    assert out.shape == (batch, output_dim), out.shape
    # bf16 matmul inputs with f32 accumulation vs f32 reference.
    assert jnp.allclose(out, ref, atol=3e-2, rtol=3e-2), "mismatch vs reference (small batch)"

    # Larger batch exercises the multi-tile grid / resident-weight path.
    big_batch = 512
    x_big = jax.random.normal(kx2, (big_batch, input_dim), jnp.float32)
    out_big = jax.block_until_ready(regression_model_forward(x_big, prepared))
    ref_big = reference_forward(x_big, params)
    assert out_big.shape == (big_batch, output_dim), out_big.shape
    assert jnp.allclose(out_big, ref_big, atol=3e-2, rtol=3e-2), "mismatch vs reference (big batch)"

    print("KERNEL_OK")
</pallas_src>

<mosaic_0001>
module attributes {stable_mosaic.version = 11 : i64} {
  func.func @_mlp_kernel(%arg0: i32, %arg1: memref<8x32xf32, #tpu.memory_space<vmem>>, %arg2: memref<32x128xbf16, #tpu.memory_space<vmem>>, %arg3: memref<128x128xbf16, #tpu.memory_space<vmem>>, %arg4: memref<128x16xbf16, #tpu.memory_space<vmem>>, %arg5: memref<3x128xf32, #tpu.memory_space<vmem>>, %arg6: memref<8x16xf32, #tpu.memory_space<vmem>>) attributes {dimension_semantics = [#tpu.dimension_semantics<parallel>], iteration_bounds = array<i64: 1>, scalar_prefetch = 0 : i64, scratch_operands = 0 : i64, tpu.core_type = #tpu.core_type<tc>, window_params = [{transform_indices = @transform_0, window_bounds = array<i64: 8, 32>}, {pipeline_mode = #tpu.pipeline_mode<synchronous>, transform_indices = @transform_1, window_bounds = array<i64: 32, 128>}, {pipeline_mode = #tpu.pipeline_mode<synchronous>, transform_indices = @transform_2, window_bounds = array<i64: 128, 128>}, {pipeline_mode = #tpu.pipeline_mode<synchronous>, transform_indices = @transform_3, window_bounds = array<i64: 128, 16>}, {pipeline_mode = #tpu.pipeline_mode<synchronous>, transform_indices = @transform_4, window_bounds = array<i64: 3, 128>}, {transform_indices = @transform_5, window_bounds = array<i64: 8, 16>}]} {
    %c0 = arith.constant 0 : index
    %c0_0 = arith.constant 0 : index
    %0 = vector.load %arg1[%c0, %c0_0] : memref<8x32xf32, #tpu.memory_space<vmem>>, vector<8x32xf32>
    %1 = arith.truncf %0 : vector<8x32xf32> to vector<8x32xbf16>
    %c0_1 = arith.constant 0 : index
    %c0_2 = arith.constant 0 : index
    %2 = vector.load %arg2[%c0_1, %c0_2] : memref<32x128xbf16, #tpu.memory_space<vmem>>, vector<32x128xbf16>
    %cst = arith.constant dense<0.000000e+00> : vector<8x128xf32>
    %3 = tpu.matmul %1, %2, %cst {dimension_numbers = #tpu.dot_dimension_numbers<[1], [0], [0], [1], [0, 0, 1, 1], [], []>} : vector<8x32xbf16>, vector<32x128xbf16>, vector<8x128xf32> -> vector<8x128xf32>
    %c0_3 = arith.constant 0 : index
    %c0_4 = arith.constant 0 : index
    %4 = vector.load %arg5[%c0_3, %c0_4] : memref<3x128xf32, #tpu.memory_space<vmem>>, vector<1x128xf32>
    %5 = vector.broadcast %4 : vector<1x128xf32> to vector<8x128xf32>
    %6 = arith.addf %3, %5 : vector<8x128xf32>
    %cst_5 = arith.constant 0.000000e+00 : f32
    %7 = vector.broadcast %cst_5 : f32 to vector<8x128xf32>
    %8 = arith.maximumf %6, %7 : vector<8x128xf32>
    %9 = arith.truncf %8 : vector<8x128xf32> to vector<8x128xbf16>
    %c0_6 = arith.constant 0 : index
    %c0_7 = arith.constant 0 : index
    %10 = vector.load %arg3[%c0_6, %c0_7] : memref<128x128xbf16, #tpu.memory_space<vmem>>, vector<128x128xbf16>
    %cst_8 = arith.constant dense<0.000000e+00> : vector<8x128xf32>
    %11 = tpu.matmul %9, %10, %cst_8 {dimension_numbers = #tpu.dot_dimension_numbers<[1], [0], [0], [1], [0, 0, 1, 1], [], []>} : vector<8x128xbf16>, vector<128x128xbf16>, vector<8x128xf32> -> vector<8x128xf32>
    %c1 = arith.constant 1 : index
    %c0_9 = arith.constant 0 : index
    %12 = vector.load %arg5[%c1, %c0_9] : memref<3x128xf32, #tpu.memory_space<vmem>>, vector<1x128xf32>
    %13 = vector.broadcast %12 : vector<1x128xf32> to vector<8x128xf32>
    %14 = arith.addf %11, %13 : vector<8x128xf32>
    %cst_10 = arith.constant 0.000000e+00 : f32
    %15 = vector.broadcast %cst_10 : f32 to vector<8x128xf32>
    %16 = arith.maximumf %14, %15 : vector<8x128xf32>
    %17 = arith.truncf %16 : vector<8x128xf32> to vector<8x128xbf16>
    %c0_11 = arith.constant 0 : index
    %c0_12 = arith.constant 0 : index
    %18 = vector.load %arg4[%c0_11, %c0_12] : memref<128x16xbf16, #tpu.memory_space<vmem>>, vector<128x16xbf16>
    %cst_13 = arith.constant dense<0.000000e+00> : vector<8x16xf32>
    %19 = tpu.matmul %17, %18, %cst_13 {dimension_numbers = #tpu.dot_dimension_numbers<[1], [0], [0], [1], [0, 0, 1, 1], [], []>} : vector<8x128xbf16>, vector<128x16xbf16>, vector<8x16xf32> -> vector<8x16xf32>
    %c2 = arith.constant 2 : index
    %c0_14 = arith.constant 0 : index
    %20 = vector.load %arg5[%c2, %c0_14] : memref<3x128xf32, #tpu.memory_space<vmem>>, vector<1x16xf32>
    %21 = vector.broadcast %20 : vector<1x16xf32> to vector<8x16xf32>
    %22 = arith.addf %19, %21 : vector<8x16xf32>
    %c0_15 = arith.constant 0 : index
    %c0_16 = arith.constant 0 : index
    %23 = vector.load %arg6[%c0_15, %c0_16] : memref<8x16xf32, #tpu.memory_space<vmem>>, vector<8x16xf32>
    tpu.vector_store %arg6[%c0_15, %c0_16], %22 {strides = array<i32>} : memref<8x16xf32, #tpu.memory_space<vmem>>, vector<8x16xf32>,
    return
  }
  func.func @transform_0(%arg0: i32) -> (i32, i32) {
    %c0_i32 = arith.constant 0 : i32
    %c0_i32_0 = arith.constant 0 : i32
    return %arg0, %c0_i32 : i32, i32
  }
  func.func @transform_1(%arg0: i32) -> (i32, i32) {
    %c0_i32 = arith.constant 0 : i32
    %c0_i32_0 = arith.constant 0 : i32
    %c0_i32_1 = arith.constant 0 : i32
    return %c0_i32, %c0_i32_0 : i32, i32
  }
  func.func @transform_2(%arg0: i32) -> (i32, i32) {
    %c0_i32 = arith.constant 0 : i32
    %c0_i32_0 = arith.constant 0 : i32
    %c0_i32_1 = arith.constant 0 : i32
    return %c0_i32, %c0_i32_0 : i32, i32
  }
  func.func @transform_3(%arg0: i32) -> (i32, i32) {
    %c0_i32 = arith.constant 0 : i32
    %c0_i32_0 = arith.constant 0 : i32
    %c0_i32_1 = arith.constant 0 : i32
    return %c0_i32, %c0_i32_0 : i32, i32
  }
  func.func @transform_4(%arg0: i32) -> (i32, i32) {
    %c0_i32 = arith.constant 0 : i32
    %c0_i32_0 = arith.constant 0 : i32
    %c0_i32_1 = arith.constant 0 : i32
    return %c0_i32, %c0_i32_0 : i32, i32
  }
  func.func @transform_5(%arg0: i32) -> (i32, i32) {
    %c0_i32 = arith.constant 0 : i32
    %c0_i32_0 = arith.constant 0 : i32
    return %arg0, %c0_i32 : i32, i32
  }
}

</mosaic_0001>

<llo_original>
// kernel: regression_model_forward.1
$region0: #{regression_model_forward.1}
  #allocation0 [shape = 'u32[]', space=smem, size = 0x4, offset = 0x4, fixed_abs, tag = 'smem constant byte address 0x4 - core index']
  #allocation1 [shape = 'u32[144,128]{1,0:T(1,128)}', space=vmem, size = 0x12000, scoped, tag = 'internal scratch']
  %s0 = inlined_call_operand.hbm [shape: f32[8,32], index: 0, kind: input, shape index: {}]
  %s1 = inlined_call_operand.vmem [shape: bf16[32,128], index: 1, kind: input, shape index: {}]
  %s2 = inlined_call_operand.vmem [shape: bf16[128,128], index: 2, kind: input, shape index: {}]
  %s3 = inlined_call_operand.vmem [shape: bf16[128,16], index: 3, kind: input, shape index: {}]
  %s4 = inlined_call_operand.hbm [shape: f32[3,128], index: 4, kind: input, shape index: {}]
  %s5 = inlined_call_operand.hbm [shape: f32[8,16], index: 5, kind: output, shape index: {}]
  %s6 = sld [smem:[#allocation0]]
  $region38: #{regression_model_forward.1} parent=0
    _
  %s8 = ssub.s32 1, %s6
  %s9 = scalar_select 0, %s8, %s6
  $region1: #{regression_model_forward.1} parent=0
    #allocation2 [shape = 'u8[4096]{0}', space=vmem, size = 0x1000, scoped, tag = 'input window, operand 0, single buffered']
    #allocation3 [shape = 's32[1]{0}', space=sflag, size = 0x4, scoped, tag = 'scoped memory for regression_model_forward.1']
    #allocation4 [shape = 's32[1]{0}', space=sflag, size = 0x4, scoped, tag = 'scoped memory for regression_model_forward.1']
    #allocation5 [shape = 'u8[2048]{0}', space=vmem, size = 0x800, scoped, tag = 'input window, operand 4, single buffered']
    #allocation6 [shape = 's32[1]{0}', space=sflag, size = 0x4, scoped, tag = 'scoped memory for regression_model_forward.1']
    #allocation7 [shape = 'u8[4096]{0}', space=vmem, size = 0x1000, scoped, tag = 'output window, operand 0, single buffered']
    %10 = vsyncpa [#allocation3], 0
    %11 = vsyncpa [#allocation6], 0
    %12 = vsyncpa [#allocation4], 0
    // Predicated region
    $region2: #{regression_model_forward.1} parent=1 // pred_check
      _
    $region3: #{regression_model_forward.1} parent=1 // pred_check_branch
      %14 = sbr.rel (0) target = $region5
    $region4: #{regression_model_forward.1} parent=1 // pred_region
      %s16 = ssub.s32 128, 128
      %17 = vsyncadd [#allocation3], %s16
      %s19 = sshll.u32 [#allocation2], 4
      %s20 = int_to_ptr.vmem [resolvable:$true] %s19
      %22 = dma.hbm_to_vmem [thread:$0]  %s0, 128, %s20, [#allocation3]
    $region5: #{regression_model_forward.1} parent=1 // pred_fallthru
      _
    // Predicated region
    $region6: #{regression_model_forward.1} parent=1 // pred_check
      _
    $region7: #{regression_model_forward.1} parent=1 // pred_check_branch
      %24 = sbr.rel (0) target = $region9
    $region8: #{regression_model_forward.1} parent=1 // pred_region
      _
    $region9: #{regression_model_forward.1} parent=1 // pred_fallthru
      _
    // Predicated region
    $region10: #{regression_model_forward.1} parent=1 // pred_check
      _
    $region11: #{regression_model_forward.1} parent=1 // pred_check_branch
      %26 = sbr.rel (0) target = $region13
    $region12: #{regression_model_forward.1} parent=1 // pred_region
      _
    $region13: #{regression_model_forward.1} parent=1 // pred_fallthru
      _
    // Predicated region
    $region14: #{regression_model_forward.1} parent=1 // pred_check
      _
    $region15: #{regression_model_forward.1} parent=1 // pred_check_branch
      %28 = sbr.rel (0) target = $region17
    $region16: #{regression_model_forward.1} parent=1 // pred_region
      _
    $region17: #{regression_model_forward.1} parent=1 // pred_fallthru
      _
    // Predicated region
    $region18: #{regression_model_forward.1} parent=1 // pred_check
      _
    $region19: #{regression_model_forward.1} parent=1 // pred_check_branch
      %30 = sbr.rel (0) target = $region21
    $region20: #{regression_model_forward.1} parent=1 // pred_region
      %s32 = ssub.s32 64, 64
      %33 = vsyncadd [#allocation6], %s32
      %s35 = sshll.u32 [#allocation5], 4
      %s36 = int_to_ptr.vmem [resolvable:$true] %s35
      %38 = dma.hbm_to_vmem [thread:$0]  %s4, 64, %s36, [#allocation6]
    $region21: #{regression_model_forward.1} parent=1 // pred_fallthru
      _
    // Predicated region
    $region22: #{regression_model_forward.1} parent=1 // pred_check
      _
    $region23: #{regression_model_forward.1} parent=1 // pred_check_branch
      %40 = sbr.rel (0) target = $region25
    $region24: #{regression_model_forward.1} parent=1 // pred_region
      %41 = dma.done [#allocation3], 128
    $region25: #{regression_model_forward.1} parent=1 // pred_fallthru
      _
    // Predicated region
    $region26: #{regression_model_forward.1} parent=1 // pred_check
      _
    $region27: #{regression_model_forward.1} parent=1 // pred_check_branch
      %43 = sbr.rel (0) target = $region29
    $region28: #{regression_model_forward.1} parent=1 // pred_region
      %44 = dma.done [#allocation6], 64
    $region29: #{regression_model_forward.1} parent=1 // pred_fallthru
      _
    %v46 = vld [vmem:[#allocation2] sm:$0xff]
    %v47 = vpack.c.bf16 %v46, %v46
    %v48 = vld [vmem:[%s1] sm:$0xf]
    %v49 = vld [vmem:[%s1 + $0x4] sm:$0xf]
    %v50 = vld [vmem:[%s1 + $0x8] sm:$0xf]
    %v51 = vld [vmem:[%s1 + $0xc] sm:$0xf]
    %v52 = vld [vmem:[#allocation5] sm:$0x1]
    %v53 = vlaneseq
    %v54 = vshrl.u32 %v53, 7
    %v55 = vsub.s32 0, %v54
    %v56 = vrot.slane %v52, %v55
    %v61 = vunpack.c.l.b16 %v48
    %v62 = vunpack.c.l.b16 %v49
    %v63 = vunpack.c.l.b16 %v50
    %v64 = vunpack.c.l.b16 %v51
    %v65 = vpack.c.b16 %v62, %v61
    %v66 = vpack.c.b16 %v64, %v63
    %vm69 = vcmask 261120
    %v71 = vsel %vm69, %v47, 0
    %73 = vmatprep.subr.bf16.mxu0 0
    %74 = vmatpush1.bf16.msra.mxu0 %v65
    %75 = vmatprep.subr.bf16.mxu0 0
    %76 = vmatpush1.bf16.msra.mxu0 %v66
    %77 = vmatprep.subr.bf16.mxu0 0
    %78 = vmatpush1.bf16.msra.mxu0 0
    %79 = vmatprep.subr.bf16.mxu0 0
    %80 = vmatpush1.bf16.msra.mxu0 0
    %81 = vmatprep.subr.bf16.mxu0 0
    %82 = vmatpush1.bf16.msra.mxu0 0
    %83 = vmatprep.subr.bf16.mxu0 0
    %84 = vmatpush1.bf16.msra.mxu0 0
    %85 = vmatprep.subr.bf16.mxu0 0
    %86 = vmatpush1.bf16.msra.mxu0 0
    %87 = vmatprep.subr.bf16.mxu0 0
    %88 = vmatpush1.bf16.msra.mxu0 0
    %89 = vmatprep.subr.bf16.mxu0 0
    %90 = vmatpush1.bf16.msra.mxu0 0
    %91 = vmatprep.subr.bf16.mxu0 0
    %92 = vmatpush1.bf16.msra.mxu0 0
    %93 = vmatprep.subr.bf16.mxu0 0
    %94 = vmatpush1.bf16.msra.mxu0 0
    %95 = vmatprep.subr.bf16.mxu0 0
    %96 = vmatpush1.bf16.msra.mxu0 0
    %97 = vmatprep.subr.bf16.mxu0 0
    %98 = vmatpush1.bf16.msra.mxu0 0
    %99 = vmatprep.subr.bf16.mxu0 0
    %100 = vmatpush1.bf16.msra.mxu0 0
    %101 = vmatprep.subr.bf16.mxu0 0
    %102 = vmatpush1.bf16.msra.mxu0 0
    %103 = vmatprep.subr.bf16.mxu0 0
    %104 = vmatpush1.bf16.msra.mxu0 0
    %105 = vmatprep.mubr.bf16.mxu0 0
    %106 = vmatmul.mubr.bf16.gmra.mrb[0].mxu0 %v71
    %v107 = vpop.f32.mrb[0].mxu0
    %v108 = vadd.f32 %v56, %v107
    %v109 = vpop.f32.mrb[0].mxu0
    %v110 = vpop.f32.mrb[0].mxu0
    %v111 = vpop.f32.mrb[0].mxu0
    %112 = vdwg.mxu0
    %v113 = vmax.f32 %v108, 0.0
    %v114 = vpack.c.bf16 %v113, %v113
    %v115 = vld [vmem:[%s2] sm:$0xf]
    %v116 = vld [vmem:[%s2 + $0x4] sm:$0xf]
    %v117 = vld [vmem:[%s2 + $0x8] sm:$0xf]
    %v118 = vld [vmem:[%s2 + $0xc] sm:$0xf]
    %v119 = vld [vmem:[%s2 + $0x10] sm:$0xf]
    %v120 = vld [vmem:[%s2 + $0x14] sm:$0xf]
    %v121 = vld [vmem:[%s2 + $0x18] sm:$0xf]
    %v122 = vld [vmem:[%s2 + $0x1c] sm:$0xf]
    %v123 = vld [vmem:[%s2 + $0x20] sm:$0xf]
    %v124 = vld [vmem:[%s2 + $0x24] sm:$0xf]
    %v125 = vld [vmem:[%s2 + $0x28] sm:$0xf]
    %v126 = vld [vmem:[%s2 + $0x2c] sm:$0xf]
    %v127 = vld [vmem:[%s2 + $0x30] sm:$0xf]
    %v128 = vld [vmem:[%s2 + $0x34] sm:$0xf]
    %v129 = vld [vmem:[%s2 + $0x38] sm:$0xf]
    %v130 = vld [vmem:[%s2 + $0x3c] sm:$0xf]
    %v131 = vld [vmem:[#allocation5 + $0x1] sm:$0x1]
    %v132 = vlaneseq
    %v133 = vshrl.u32 %v132, 7
    %v134 = vsub.s32 0, %v133
    %v135 = vrot.slane %v131, %v134
    %v152 = vunpack.c.l.b16 %v115
    %v153 = vunpack.c.l.b16 %v116
    %v154 = vunpack.c.l.b16 %v117
    %v155 = vunpack.c.l.b16 %v118
    %v156 = vunpack.c.l.b16 %v119
    %v157 = vunpack.c.l.b16 %v120
    %v158 = vunpack.c.l.b16 %v121
    %v159 = vunpack.c.l.b16 %v122
    %v160 = vunpack.c.l.b16 %v123
    %v161 = vunpack.c.l.b16 %v124
    %v162 = vunpack.c.l.b16 %v125
    %v163 = vunpack.c.l.b16 %v126
    %v164 = vunpack.c.l.b16 %v127
    %v165 = vunpack.c.l.b16 %v128
    %v166 = vunpack.c.l.b16 %v129
    %v167 = vunpack.c.l.b16 %v130
    %v168 = vpack.c.b16 %v153, %v152
    %v169 = vpack.c.b16 %v155, %v154
    %v170 = vpack.c.b16 %v157, %v156
    %v171 = vpack.c.b16 %v159, %v158
    %v172 = vpack.c.b16 %v161, %v160
    %v173 = vpack.c.b16 %v163, %v162
    %v174 = vpack.c.b16 %v165, %v164
    %v175 = vpack.c.b16 %v167, %v166
    %184 = vmatprep.subr.bf16.mxu0 0
    %185 = vmatpush1.bf16.msra.mxu0 %v168
    %186 = vmatprep.subr.bf16.mxu0 0
    %187 = vmatpush1.bf16.msra.mxu0 %v169
    %188 = vmatprep.subr.bf16.mxu0 0
    %189 = vmatpush1.bf16.msra.mxu0 %v170
    %190 = vmatprep.subr.bf16.mxu0 0
    %191 = vmatpush1.bf16.msra.mxu0 %v171
    %192 = vmatprep.subr.bf16.mxu0 0
    %193 = vmatpush1.bf16.msra.mxu0 %v172
    %194 = vmatprep.subr.bf16.mxu0 0
    %195 = vmatpush1.bf16.msra.mxu0 %v173
    %196 = vmatprep.subr.bf16.mxu0 0
    %197 = vmatpush1.bf16.msra.mxu0 %v174
    %198 = vmatprep.subr.bf16.mxu0 0
    %199 = vmatpush1.bf16.msra.mxu0 %v175
    %200 = vmatprep.subr.bf16.mxu0 0
    %201 = vmatpush1.bf16.msra.mxu0 0
    %202 = vmatprep.subr.bf16.mxu0 0
    %203 = vmatpush1.bf16.msra.mxu0 0
    %204 = vmatprep.subr.bf16.mxu0 0
    %205 = vmatpush1.bf16.msra.mxu0 0
    %206 = vmatprep.subr.bf16.mxu0 0
    %207 = vmatpush1.bf16.msra.mxu0 0
    %208 = vmatprep.subr.bf16.mxu0 0
    %209 = vmatpush1.bf16.msra.mxu0 0
    %210 = vmatprep.subr.bf16.mxu0 0
    %211 = vmatpush1.bf16.msra.mxu0 0
    %212 = vmatprep.subr.bf16.mxu0 0
    %213 = vmatpush1.bf16.msra.mxu0 0
    %214 = vmatprep.subr.bf16.mxu0 0
    %215 = vmatpush1.bf16.msra.mxu0 0
    %216 = vmatprep.mubr.bf16.mxu0 0
    %217 = vmatmul.mubr.bf16.gmra.mrb[0].mxu0 %v114
    %v218 = vpop.f32.mrb[0].mxu0
    %v219 = vadd.f32 %v135, %v218
    %v220 = vpop.f32.mrb[0].mxu0
    %v221 = vpop.f32.mrb[0].mxu0
    %v222 = vpop.f32.mrb[0].mxu0
    %223 = vdwg.mxu0
    %v224 = vmax.f32 %v219, 0.0
    %v225 = vpack.c.bf16 %v224, %v224
    %v226 = vld [vmem:[%s3] sm:$0xf]
    %v227 = vld [vmem:[%s3 + $0x4] sm:$0xf]
    %v228 = vld [vmem:[%s3 + $0x8] sm:$0xf]
    %v229 = vld [vmem:[%s3 + $0xc] sm:$0xf]
    %v230 = vld [vmem:[%s3 + $0x10] sm:$0xf]
    %v231 = vld [vmem:[%s3 + $0x14] sm:$0xf]
    %v232 = vld [vmem:[%s3 + $0x18] sm:$0xf]
    %v233 = vld [vmem:[%s3 + $0x1c] sm:$0xf]
    %v234 = vld [vmem:[%s3 + $0x20] sm:$0xf]
    %v235 = vld [vmem:[%s3 + $0x24] sm:$0xf]
    %v236 = vld [vmem:[%s3 + $0x28] sm:$0xf]
    %v237 = vld [vmem:[%s3 + $0x2c] sm:$0xf]
    %v238 = vld [vmem:[%s3 + $0x30] sm:$0xf]
    %v239 = vld [vmem:[%s3 + $0x34] sm:$0xf]
    %v240 = vld [vmem:[%s3 + $0x38] sm:$0xf]
    %v241 = vld [vmem:[%s3 + $0x3c] sm:$0xf]
    %v242 = vld [vmem:[#allocation5 + $0x2] sm:$0x1]
    %v243 = vlaneseq
    %v244 = vshrl.u32 %v243, 7
    %v245 = vsub.s32 0, %v244
    %v246 = vrot.slane %v242, %v245
    %v263 = vunpack.c.l.b16 %v226
    %v264 = vunpack.c.l.b16 %v227
    %v265 = vunpack.c.l.b16 %v228
    %v266 = vunpack.c.l.b16 %v229
    %v267 = vunpack.c.l.b16 %v230
    %v268 = vunpack.c.l.b16 %v231
    %v269 = vunpack.c.l.b16 %v232
    %v270 = vunpack.c.l.b16 %v233
    %v271 = vunpack.c.l.b16 %v234
    %v272 = vunpack.c.l.b16 %v235
    %v273 = vunpack.c.l.b16 %v236
    %v274 = vunpack.c.l.b16 %v237
    %v275 = vunpack.c.l.b16 %v238
    %v276 = vunpack.c.l.b16 %v239
    %v277 = vunpack.c.l.b16 %v240
    %v278 = vunpack.c.l.b16 %v241
    %v279 = vpack.c.b16 %v264, %v263
    %v280 = vpack.c.b16 %v266, %v265
    %v281 = vpack.c.b16 %v268, %v267
    %v282 = vpack.c.b16 %v270, %v269
    %v283 = vpack.c.b16 %v272, %v271
    %v284 = vpack.c.b16 %v274, %v273
    %v285 = vpack.c.b16 %v276, %v275
    %v286 = vpack.c.b16 %v278, %v277
    %295 = vmatprep.subr.bf16.mxu0 0
    %296 = vmatpush1.bf16.msra.mxu0 %v279
    %297 = vmatprep.subr.bf16.mxu0 0
    %298 = vmatpush1.bf16.msra.mxu0 %v280
    %299 = vmatprep.subr.bf16.mxu0 0
    %300 = vmatpush1.bf16.msra.mxu0 %v281
    %301 = vmatprep.subr.bf16.mxu0 0
    %302 = vmatpush1.bf16.msra.mxu0 %v282
    %303 = vmatprep.subr.bf16.mxu0 0
    %304 = vmatpush1.bf16.msra.mxu0 %v283
    %305 = vmatprep.subr.bf16.mxu0 0
    %306 = vmatpush1.bf16.msra.mxu0 %v284
    %307 = vmatprep.subr.bf16.mxu0 0
    %308 = vmatpush1.bf16.msra.mxu0 %v285
    %309 = vmatprep.subr.bf16.mxu0 0
    %310 = vmatpush1.bf16.msra.mxu0 %v286
    %311 = vmatprep.subr.bf16.mxu0 0
    %312 = vmatpush1.bf16.msra.mxu0 0
    %313 = vmatprep.subr.bf16.mxu0 0
    %314 = vmatpush1.bf16.msra.mxu0 0
    %315 = vmatprep.subr.bf16.mxu0 0
    %316 = vmatpush1.bf16.msra.mxu0 0
    %317 = vmatprep.subr.bf16.mxu0 0
    %318 = vmatpush1.bf16.msra.mxu0 0
    %319 = vmatprep.subr.bf16.mxu0 0
    %320 = vmatpush1.bf16.msra.mxu0 0
    %321 = vmatprep.subr.bf16.mxu0 0
    %322 = vmatpush1.bf16.msra.mxu0 0
    %323 = vmatprep.subr.bf16.mxu0 0
    %324 = vmatpush1.bf16.msra.mxu0 0
    %325 = vmatprep.subr.bf16.mxu0 0
    %326 = vmatpush1.bf16.msra.mxu0 0
    %327 = vmatprep.mubr.bf16.mxu0 0
    %328 = vmatmul.mubr.bf16.gmra.mrb[0].mxu0 %v225
    %v329 = vpop.f32.mrb[0].mxu0
    %v330 = vadd.f32 %v246, %v329
    %v331 = vpop.f32.mrb[0].mxu0
    %v332 = vpop.f32.mrb[0].mxu0
    %v333 = vpop.f32.mrb[0].mxu0
    %334 = vdwg.mxu0
    %vm335 = vcmask 130048
    %336 = vst.msk [vmem:[#allocation7] sm:$0xff] %vm335, %v330
    // Predicated region
    $region30: #{regression_model_forward.1} parent=1 // pred_check
      _
    $region31: #{regression_model_forward.1} parent=1 // pred_check_branch
      %338 = sbr.rel (0) target = $region33
    $region32: #{regression_model_forward.1} parent=1 // pred_region
      %s340 = ssub.s32 128, 128
      %341 = vsyncadd [#allocation4], %s340
      %s343 = sshll.u32 [#allocation7], 4
      %s344 = int_to_ptr.vmem [resolvable:$true] %s343
      %346 = dma.vmem_to_hbm [thread:$0]  %s344, 128, %s5, [#allocation4]
    $region33: #{regression_model_forward.1} parent=1 // pred_fallthru
      _
    // Predicated region
    $region34: #{regression_model_forward.1} parent=1 // pred_check
      _
    $region35: #{regression_model_forward.1} parent=1 // pred_check_branch
      %348 = sbr.rel (0) target = $region37
    $region36: #{regression_model_forward.1} parent=1 // pred_region
      %349 = dma.done [#allocation4], 128
    $region37: #{regression_model_forward.1} parent=1 // pred_fallthru
      _
    %350 = vsyncpa [#allocation3], 1
    %351 = vsyncpa [#allocation6], 1
    %352 = vsyncpa [#allocation4], 1

</llo_original>
